<compile_context>
chip_gen: v6e
topology: v6e:2x2x1
jax: 0.10.0
libtpu: 0.0.40
codegen_flags: <defaults>
</compile_context>

<pallas_src>
import functools

import jax
import jax.numpy as jnp
from jax import lax
from jax.experimental import pallas as pl
from jax.experimental.pallas import tpu as pltpu


def _topk_routing_kernel(q_ref, k_ref, w_ref, idx_ref, *, scale, topk,
                         matmul_dtype):
    # q_ref, k_ref: (TB, P, C) native dtype
    # w_ref:  (TB, P, topk) out_dtype     idx_ref: (TB, P, topk) int32
    q = q_ref[...]
    k = k_ref[...]
    if matmul_dtype is not None:
        q = q.astype(matmul_dtype)
        k = k.astype(matmul_dtype)

    # attn_logit = q @ k^T (contract last dims, batched; no materialized k.T),
    # f32 accumulation on the MXU.  The temperature is applied after top-k
    # (exact: scale > 0 preserves rank order).
    logits = jnp.einsum("bpc,bqc->bpq", q, k,
                        preferred_element_type=jnp.float32)     # (TB, P, P)
    TB, P, PK = logits.shape

    neg = jnp.float32(-1e30)  # finite sentinel (avoids inf-inf NaN corners)
    # Hoisted constants (JAX does not CSE broadcasts; build them once).
    col = lax.broadcasted_iota(jnp.int32, (TB, P, PK), 2).astype(jnp.float32)
    big = jnp.float32(PK)
    out_col = lax.broadcasted_iota(jnp.int32, (TB, P, topk), 2)  # tiny (topk lanes)

    vals_k = jnp.full((TB, P, topk), neg, jnp.float32)
    idx_k = jnp.zeros((TB, P, topk), jnp.float32)

    work = logits
    m0 = None
    # topk is small: unrolled at trace time so LLO can overlap XLU / VPU work.
    for j in range(topk):
        m = jnp.max(work, axis=-1, keepdims=True)                # XLU (TB,P,1)
        if j == 0:
            m0 = m
        hit = work == m                                          # VPU
        # first-hit index (lowest matching lane) — tie-safe, exact for P < 2^24.
        i_f = jnp.min(jnp.where(hit, col, big), axis=-1, keepdims=True)
        # mask only the selected entry so duplicate maxima stay available.
        work = jnp.where(col == i_f, neg, work)
        # place into slot j of the tiny (TB, P, topk) buffers.
        vals_k = jnp.where(out_col == j, m, vals_k)
        idx_k = jnp.where(out_col == j, i_f, idx_k)

    # softmax(scale * topk_values); slot 0 holds the row max -> stable exp.
    e = jnp.exp((vals_k - m0) * scale)
    denom = jnp.sum(e, axis=-1, keepdims=True)
    r = e * pl.reciprocal(denom, approx=True)                    # EUP reciprocal

    w_ref[...] = r.astype(w_ref.dtype)
    idx_ref[...] = idx_k.astype(jnp.int32)


def _pick_tile_n(N, P, C, topk, itemsize):
    """Target ~2 MiB of live bytes per grid step; keep >=2 steps when N >= 2."""
    per_batch = (4 * P * C * itemsize              # q, k double-buffered
                 + 4 * P * max(P, 128) * 4         # logits / work / col / hit temps
                 + 4 * P * max(topk, 8) * 4)       # outputs double-buffered
    target = max(1, (2 << 20) // per_batch)
    target = min(target, 64)                       # step overhead already amortized
    if N >= 2:
        target = min(target, N // 2)               # >=2 steps: v7x 2-TC megacore split
    target = max(1, min(target, N))
    for d in range(target, 0, -1):                 # largest divisor of N <= target
        if N % d == 0:
            return d
    return 1


def topk_routing(query, key, *, topk=4, qk_scale=None, tile_n=None,
                 matmul_dtype=None, out_dtype=jnp.float32):
    """query, key: (N, P, C).

    Returns (r_weight (N, P, topk) out_dtype, topk_index (N, P, topk) int32).
    On v5e, pass matmul_dtype=jnp.bfloat16 for f32 inputs (rank order + softmax
    over topk values is bf16-safe); pass out_dtype=jnp.bfloat16 if the consumer
    multiplies the weights against bf16 KV.
    """
    N, P, C = query.shape
    assert key.shape == (N, P, C)
    assert 1 <= topk <= P, "topk must satisfy 1 <= topk <= P"
    scale = float(qk_scale) if qk_scale is not None else float(C) ** (-0.5)
    # scale is applied after the top-k selection; needs a positive temperature.
    assert scale > 0.0, "qk_scale must be > 0"

    if tile_n is None:
        tile_n = _pick_tile_n(N, P, C, topk, jnp.dtype(query.dtype).itemsize)
    tile_n = max(1, min(tile_n, N))
    while N % tile_n:
        tile_n -= 1

    kernel = functools.partial(_topk_routing_kernel, scale=scale, topk=topk,
                               matmul_dtype=matmul_dtype)

    r_weight, topk_index = pl.pallas_call(
        kernel,
        out_shape=(
            jax.ShapeDtypeStruct((N, P, topk), out_dtype),
            jax.ShapeDtypeStruct((N, P, topk), jnp.int32),
        ),
        grid_spec=pltpu.PrefetchScalarGridSpec(
            num_scalar_prefetch=0,
            grid=(N // tile_n,),
            in_specs=[
                pl.BlockSpec((tile_n, P, C), lambda b: (b, 0, 0)),  # query tile
                pl.BlockSpec((tile_n, P, C), lambda b: (b, 0, 0)),  # key tile (unpadded)
            ],
            out_specs=[
                pl.BlockSpec((tile_n, P, topk), lambda b: (b, 0, 0)),
                pl.BlockSpec((tile_n, P, topk), lambda b: (b, 0, 0)),
            ],
        ),
        compiler_params=pltpu.CompilerParams(
            dimension_semantics=("parallel",),
            vmem_limit_bytes=32 << 20,   # explicit; safe on v7x's 64 MiB VMEM
        ),
    )(query, key)

    return r_weight, topk_index


def _reference(query, key, topk=4, qk_scale=None):
    N, P, C = query.shape
    scale = qk_scale if qk_scale is not None else C ** (-0.5)
    # scale > 0 => topk(scale*QK^T) selects the same entries as topk(QK^T);
    # applying the temperature inside the softmax matches the module exactly.
    logits = jnp.einsum("npc,nqc->npq", query, key)
    vals, idx = lax.top_k(logits, topk)
    return jax.nn.softmax(vals * scale, axis=-1), idx


if __name__ == "__main__":
    # TODO(synk): param_routing=True (nn.Linear emb) not included since the default
    #             __init__ uses Identity; the linear would be trivial glue before the kernel.
    N, P, C, TOPK = 2, 64, 32, 4  # p^2 = 64 regions (p=8), qk_dim=32

    key0 = jax.random.PRNGKey(0)
    kq, kk = jax.random.split(key0)
    query = jax.random.normal(kq, (N, P, C), dtype=jnp.float32)
    keyt = jax.random.normal(kk, (N, P, C), dtype=jnp.float32)

    r_weight, topk_index = topk_routing(query, keyt, topk=TOPK)
    jax.block_until_ready((r_weight, topk_index))

    r_ref, idx_ref = _reference(query, keyt, topk=TOPK)
    assert r_weight.shape == (N, P, TOPK) and topk_index.shape == (N, P, TOPK)
    # 2e-3 tolerance: softmax denominator uses the EUP approximate reciprocal.
    assert jnp.allclose(r_weight, r_ref, atol=2e-3, rtol=2e-3), "routing weights mismatch"
    assert jnp.array_equal(topk_index, idx_ref), "topk indices mismatch"

    print("KERNEL_OK")
</pallas_src>

<mosaic_0001>
module attributes {stable_mosaic.version = 11 : i64} {
  func.func @_topk_routing_kernel(%arg0: i32, %arg1: memref<1x64x32xf32, #tpu.memory_space<vmem>>, %arg2: memref<1x64x32xf32, #tpu.memory_space<vmem>>, %arg3: memref<1x64x4xf32, #tpu.memory_space<vmem>>, %arg4: memref<1x64x4xi32, #tpu.memory_space<vmem>>) attributes {dimension_semantics = [#tpu.dimension_semantics<parallel>], iteration_bounds = array<i64: 2>, scalar_prefetch = 0 : i64, scratch_operands = 0 : i64, tpu.core_type = #tpu.core_type<tc>, window_params = [{transform_indices = @transform_0, window_bounds = array<i64: 1, 64, 32>}, {transform_indices = @transform_1, window_bounds = array<i64: 1, 64, 32>}, {transform_indices = @transform_2, window_bounds = array<i64: 1, 64, 4>}, {transform_indices = @transform_3, window_bounds = array<i64: 1, 64, 4>}]} {
    %c0 = arith.constant 0 : index
    %c0_0 = arith.constant 0 : index
    %c0_1 = arith.constant 0 : index
    %0 = vector.load %arg1[%c0, %c0_0, %c0_1] : memref<1x64x32xf32, #tpu.memory_space<vmem>>, vector<1x64x32xf32>
    %c0_2 = arith.constant 0 : index
    %c0_3 = arith.constant 0 : index
    %c0_4 = arith.constant 0 : index
    %1 = vector.load %arg2[%c0_2, %c0_3, %c0_4] : memref<1x64x32xf32, #tpu.memory_space<vmem>>, vector<1x64x32xf32>
    "tpu.trace_start"() <{level = 10 : i32, message = "bpc,bqc->bpq"}> : () -> ()
    %cst = arith.constant dense<0.000000e+00> : vector<1x64x64xf32>
    %2 = tpu.matmul %0, %1, %cst {dimension_numbers = #tpu.dot_dimension_numbers<[2], [2], [1], [1], [0, 0, 0, 1, 1, 1], [0], [0]>} : vector<1x64x32xf32>, vector<1x64x32xf32>, vector<1x64x64xf32> -> vector<1x64x64xf32>
    "tpu.trace_stop"() : () -> ()
    %3 = tpu.iota {dimensions = array<i32: 2>} : vector<1x64x64xi32>
    %4 = arith.sitofp %3 : vector<1x64x64xi32> to vector<1x64x64xf32>
    %5 = tpu.iota {dimensions = array<i32: 2>} : vector<1x64x4xi32>
    %cst_5 = arith.constant -1.000000e+30 : f32
    %6 = vector.broadcast %cst_5 : f32 to vector<1x64x4xf32>
    %cst_6 = arith.constant 0.000000e+00 : f32
    %7 = vector.broadcast %cst_6 : f32 to vector<1x64x4xf32>
    %cst_7 = arith.constant dense<0xFF800000> : vector<1x64xf32>
    %8 = vector.multi_reduction <maximumf>, %2, %cst_7 [2] : vector<1x64x64xf32> to vector<1x64xf32>
    %9 = vector.shape_cast %8 : vector<1x64xf32> to vector<1x64x1xf32>
    %10 = vector.broadcast %9 : vector<1x64x1xf32> to vector<1x64x64xf32>
    %11 = arith.cmpf oeq, %2, %10 : vector<1x64x64xf32>
    %cst_8 = arith.constant 6.400000e+01 : f32
    %12 = vector.broadcast %cst_8 : f32 to vector<1x64x64xf32>
    %13 = arith.select %11, %4, %12 : vector<1x64x64xi1>, vector<1x64x64xf32>
    %cst_9 = arith.constant dense<0x7F800000> : vector<1x64xf32>
    %14 = vector.multi_reduction <minimumf>, %13, %cst_9 [2] : vector<1x64x64xf32> to vector<1x64xf32>
    %15 = vector.shape_cast %14 : vector<1x64xf32> to vector<1x64x1xf32>
    %16 = vector.broadcast %15 : vector<1x64x1xf32> to vector<1x64x64xf32>
    %17 = arith.cmpf oeq, %4, %16 : vector<1x64x64xf32>
    %cst_10 = arith.constant -1.000000e+30 : f32
    %18 = vector.broadcast %cst_10 : f32 to vector<1x64x64xf32>
    %19 = arith.select %17, %18, %2 : vector<1x64x64xi1>, vector<1x64x64xf32>
    %c0_i32 = arith.constant 0 : i32
    %20 = vector.broadcast %c0_i32 : i32 to vector<1x64x4xi32>
    %21 = arith.cmpi eq, %5, %20 : vector<1x64x4xi32>
    %22 = vector.shape_cast %9 : vector<1x64x1xf32> to vector<1x64x1xf32>
    %23 = vector.broadcast %22 : vector<1x64x1xf32> to vector<1x64x4xf32>
    %24 = arith.select %21, %23, %6 : vector<1x64x4xi1>, vector<1x64x4xf32>
    %c0_i32_11 = arith.constant 0 : i32
    %25 = vector.broadcast %c0_i32_11 : i32 to vector<1x64x4xi32>
    %26 = arith.cmpi eq, %5, %25 : vector<1x64x4xi32>
    %27 = vector.shape_cast %15 : vector<1x64x1xf32> to vector<1x64x1xf32>
    %28 = vector.broadcast %27 : vector<1x64x1xf32> to vector<1x64x4xf32>
    %29 = arith.select %26, %28, %7 : vector<1x64x4xi1>, vector<1x64x4xf32>
    %cst_12 = arith.constant dense<0xFF800000> : vector<1x64xf32>
    %30 = vector.multi_reduction <maximumf>, %19, %cst_12 [2] : vector<1x64x64xf32> to vector<1x64xf32>
    %31 = vector.shape_cast %30 : vector<1x64xf32> to vector<1x64x1xf32>
    %32 = vector.broadcast %31 : vector<1x64x1xf32> to vector<1x64x64xf32>
    %33 = arith.cmpf oeq, %19, %32 : vector<1x64x64xf32>
    %cst_13 = arith.constant 6.400000e+01 : f32
    %34 = vector.broadcast %cst_13 : f32 to vector<1x64x64xf32>
    %35 = arith.select %33, %4, %34 : vector<1x64x64xi1>, vector<1x64x64xf32>
    %cst_14 = arith.constant dense<0x7F800000> : vector<1x64xf32>
    %36 = vector.multi_reduction <minimumf>, %35, %cst_14 [2] : vector<1x64x64xf32> to vector<1x64xf32>
    %37 = vector.shape_cast %36 : vector<1x64xf32> to vector<1x64x1xf32>
    %38 = vector.broadcast %37 : vector<1x64x1xf32> to vector<1x64x64xf32>
    %39 = arith.cmpf oeq, %4, %38 : vector<1x64x64xf32>
    %cst_15 = arith.constant -1.000000e+30 : f32
    %40 = vector.broadcast %cst_15 : f32 to vector<1x64x64xf32>
    %41 = arith.select %39, %40, %19 : vector<1x64x64xi1>, vector<1x64x64xf32>
    %c1_i32 = arith.constant 1 : i32
    %42 = vector.broadcast %c1_i32 : i32 to vector<1x64x4xi32>
    %43 = arith.cmpi eq, %5, %42 : vector<1x64x4xi32>
    %44 = vector.shape_cast %31 : vector<1x64x1xf32> to vector<1x64x1xf32>
    %45 = vector.broadcast %44 : vector<1x64x1xf32> to vector<1x64x4xf32>
    %46 = arith.select %43, %45, %24 : vector<1x64x4xi1>, vector<1x64x4xf32>
    %c1_i32_16 = arith.constant 1 : i32
    %47 = vector.broadcast %c1_i32_16 : i32 to vector<1x64x4xi32>
    %48 = arith.cmpi eq, %5, %47 : vector<1x64x4xi32>
    %49 = vector.shape_cast %37 : vector<1x64x1xf32> to vector<1x64x1xf32>
    %50 = vector.broadcast %49 : vector<1x64x1xf32> to vector<1x64x4xf32>
    %51 = arith.select %48, %50, %29 : vector<1x64x4xi1>, vector<1x64x4xf32>
    %cst_17 = arith.constant dense<0xFF800000> : vector<1x64xf32>
    %52 = vector.multi_reduction <maximumf>, %41, %cst_17 [2] : vector<1x64x64xf32> to vector<1x64xf32>
    %53 = vector.shape_cast %52 : vector<1x64xf32> to vector<1x64x1xf32>
    %54 = vector.broadcast %53 : vector<1x64x1xf32> to vector<1x64x64xf32>
    %55 = arith.cmpf oeq, %41, %54 : vector<1x64x64xf32>
    %cst_18 = arith.constant 6.400000e+01 : f32
    %56 = vector.broadcast %cst_18 : f32 to vector<1x64x64xf32>
    %57 = arith.select %55, %4, %56 : vector<1x64x64xi1>, vector<1x64x64xf32>
    %cst_19 = arith.constant dense<0x7F800000> : vector<1x64xf32>
    %58 = vector.multi_reduction <minimumf>, %57, %cst_19 [2] : vector<1x64x64xf32> to vector<1x64xf32>
    %59 = vector.shape_cast %58 : vector<1x64xf32> to vector<1x64x1xf32>
    %60 = vector.broadcast %59 : vector<1x64x1xf32> to vector<1x64x64xf32>
    %61 = arith.cmpf oeq, %4, %60 : vector<1x64x64xf32>
    %cst_20 = arith.constant -1.000000e+30 : f32
    %62 = vector.broadcast %cst_20 : f32 to vector<1x64x64xf32>
    %63 = arith.select %61, %62, %41 : vector<1x64x64xi1>, vector<1x64x64xf32>
    %c2_i32 = arith.constant 2 : i32
    %64 = vector.broadcast %c2_i32 : i32 to vector<1x64x4xi32>
    %65 = arith.cmpi eq, %5, %64 : vector<1x64x4xi32>
    %66 = vector.shape_cast %53 : vector<1x64x1xf32> to vector<1x64x1xf32>
    %67 = vector.broadcast %66 : vector<1x64x1xf32> to vector<1x64x4xf32>
    %68 = arith.select %65, %67, %46 : vector<1x64x4xi1>, vector<1x64x4xf32>
    %c2_i32_21 = arith.constant 2 : i32
    %69 = vector.broadcast %c2_i32_21 : i32 to vector<1x64x4xi32>
    %70 = arith.cmpi eq, %5, %69 : vector<1x64x4xi32>
    %71 = vector.shape_cast %59 : vector<1x64x1xf32> to vector<1x64x1xf32>
    %72 = vector.broadcast %71 : vector<1x64x1xf32> to vector<1x64x4xf32>
    %73 = arith.select %70, %72, %51 : vector<1x64x4xi1>, vector<1x64x4xf32>
    %cst_22 = arith.constant dense<0xFF800000> : vector<1x64xf32>
    %74 = vector.multi_reduction <maximumf>, %63, %cst_22 [2] : vector<1x64x64xf32> to vector<1x64xf32>
    %75 = vector.shape_cast %74 : vector<1x64xf32> to vector<1x64x1xf32>
    %76 = vector.broadcast %75 : vector<1x64x1xf32> to vector<1x64x64xf32>
    %77 = arith.cmpf oeq, %63, %76 : vector<1x64x64xf32>
    %cst_23 = arith.constant 6.400000e+01 : f32
    %78 = vector.broadcast %cst_23 : f32 to vector<1x64x64xf32>
    %79 = arith.select %77, %4, %78 : vector<1x64x64xi1>, vector<1x64x64xf32>
    %cst_24 = arith.constant dense<0x7F800000> : vector<1x64xf32>
    %80 = vector.multi_reduction <minimumf>, %79, %cst_24 [2] : vector<1x64x64xf32> to vector<1x64xf32>
    %81 = vector.shape_cast %80 : vector<1x64xf32> to vector<1x64x1xf32>
    %c3_i32 = arith.constant 3 : i32
    %82 = vector.broadcast %c3_i32 : i32 to vector<1x64x4xi32>
    %83 = arith.cmpi eq, %5, %82 : vector<1x64x4xi32>
    %84 = vector.shape_cast %75 : vector<1x64x1xf32> to vector<1x64x1xf32>
    %85 = vector.broadcast %84 : vector<1x64x1xf32> to vector<1x64x4xf32>
    %86 = arith.select %83, %85, %68 : vector<1x64x4xi1>, vector<1x64x4xf32>
    %c3_i32_25 = arith.constant 3 : i32
    %87 = vector.broadcast %c3_i32_25 : i32 to vector<1x64x4xi32>
    %88 = arith.cmpi eq, %5, %87 : vector<1x64x4xi32>
    %89 = vector.shape_cast %81 : vector<1x64x1xf32> to vector<1x64x1xf32>
    %90 = vector.broadcast %89 : vector<1x64x1xf32> to vector<1x64x4xf32>
    %91 = arith.select %88, %90, %73 : vector<1x64x4xi1>, vector<1x64x4xf32>
    %92 = vector.broadcast %9 : vector<1x64x1xf32> to vector<1x64x4xf32>
    %93 = arith.subf %86, %92 : vector<1x64x4xf32>
    %cst_26 = arith.constant 0.176776692 : f32
    %94 = vector.broadcast %cst_26 : f32 to vector<1x64x4xf32>
    %95 = arith.mulf %93, %94 : vector<1x64x4xf32>
    %96 = math.exp %95 : vector<1x64x4xf32>
    %cst_27 = arith.constant dense<0.000000e+00> : vector<1x64xf32>
    %97 = vector.multi_reduction <add>, %96, %cst_27 [2] : vector<1x64x4xf32> to vector<1x64xf32>
    %98 = vector.shape_cast %97 : vector<1x64xf32> to vector<1x64x1xf32>
    %99 = tpu.reciprocal %98 {approx = true} : vector<1x64x1xf32> -> vector<1x64x1xf32>
    %100 = vector.broadcast %99 : vector<1x64x1xf32> to vector<1x64x4xf32>
    %101 = arith.mulf %96, %100 : vector<1x64x4xf32>
    %c0_28 = arith.constant 0 : index
    %c0_29 = arith.constant 0 : index
    %c0_30 = arith.constant 0 : index
    %102 = vector.load %arg3[%c0_28, %c0_29, %c0_30] : memref<1x64x4xf32, #tpu.memory_space<vmem>>, vector<1x64x4xf32>
    tpu.vector_store %arg3[%c0_28, %c0_29, %c0_30], %101 {strides = array<i32>} : memref<1x64x4xf32, #tpu.memory_space<vmem>>, vector<1x64x4xf32>,
    %103 = arith.fptosi %91 : vector<1x64x4xf32> to vector<1x64x4xi32>
    %c0_31 = arith.constant 0 : index
    %c0_32 = arith.constant 0 : index
    %c0_33 = arith.constant 0 : index
    %104 = vector.load %arg4[%c0_31, %c0_32, %c0_33] : memref<1x64x4xi32, #tpu.memory_space<vmem>>, vector<1x64x4xi32>
    tpu.vector_store %arg4[%c0_31, %c0_32, %c0_33], %103 {strides = array<i32>} : memref<1x64x4xi32, #tpu.memory_space<vmem>>, vector<1x64x4xi32>,
    return
  }
  func.func @transform_0(%arg0: i32) -> (i32, i32, i32) {
    %c0_i32 = arith.constant 0 : i32
    %c0_i32_0 = arith.constant 0 : i32
    %c0_i32_1 = arith.constant 0 : i32
    return %arg0, %c0_i32, %c0_i32_0 : i32, i32, i32
  }
  func.func @transform_1(%arg0: i32) -> (i32, i32, i32) {
    %c0_i32 = arith.constant 0 : i32
    %c0_i32_0 = arith.constant 0 : i32
    %c0_i32_1 = arith.constant 0 : i32
    return %arg0, %c0_i32, %c0_i32_0 : i32, i32, i32
  }
  func.func @transform_2(%arg0: i32) -> (i32, i32, i32) {
    %c0_i32 = arith.constant 0 : i32
    %c0_i32_0 = arith.constant 0 : i32
    %c0_i32_1 = arith.constant 0 : i32
    return %arg0, %c0_i32, %c0_i32_0 : i32, i32, i32
  }
  func.func @transform_3(%arg0: i32) -> (i32, i32, i32) {
    %c0_i32 = arith.constant 0 : i32
    %c0_i32_0 = arith.constant 0 : i32
    %c0_i32_1 = arith.constant 0 : i32
    return %arg0, %c0_i32, %c0_i32_0 : i32, i32, i32
  }
}

</mosaic_0001>

<llo_original>
// kernel: tpu_custom_call.1
$region0: #{tpu_custom_call.1}
  #allocation0 [shape = 'u32[]', space=smem, size = 0x4, offset = 0x4, fixed_abs, tag = 'smem constant byte address 0x4 - core index']
  #allocation1 [shape = 'u32[144,128]{1,0:T(1,128)}', space=vmem, size = 0x12000, scoped, tag = 'internal scratch']
  %s0 = inlined_call_operand.vmem [shape: f32[2,64,32], index: 0, kind: input, shape index: {}]
  %s1 = inlined_call_operand.vmem [shape: f32[2,64,32], index: 1, kind: input, shape index: {}]
  %s2 = inlined_call_operand.vmem [shape: f32[2,64,4], index: 2, kind: output, shape index: {0}]
  %s3 = inlined_call_operand.vmem [shape: s32[2,64,4], index: 3, kind: output, shape index: {1}]
  %4 = xla_tuple %s2, %s3
  %s5 = sld [smem:[#allocation0]]
  $region49: #{tpu_custom_call.1} parent=0
    _
  %s7 = ssub.s32 1, %s5
  %s8 = scalar_select 0, %s7, %s5
  loop: start=0, step=1, limit=4
  $region2: #{tpu_custom_call.1} parent=0 // loop_pre_header
    _
  $region3: #{tpu_custom_call.1} parent=0 // loop_header
    %s10 = sphi 0, %s14
    %p11 = scmp.ge.s32.totalorder %s10, 4
    %s20 = sphi 0, %s22
    %s23 = sphi 0, %s20
    %s24 = sphi 0, %s23
    %s40 = sphi 0, %s24
    %s46 = sphi 0, %s48
    %s49 = sphi 0, %s46
    %s50 = sphi 0, %s49
    %s66 = sphi 0, %s50
    %s72 = sphi 0, %s74
    %s75 = sphi 0, %s72
    %s76 = sphi 0, %s75
    %s92 = sphi 0, %s76
    %s98 = sphi 0, %s100
    %s101 = sphi 0, %s98
    %s102 = sphi 0, %s101
    %s118 = sphi 0, %s102
  $region4: #{tpu_custom_call.1} parent=0 // loop_header_branch
    %13 = sbr.rel (%p11) target = $region8
  $region5: #{tpu_custom_call.1} parent=0 // loop_body
    %s15 = ssub.s32 %s10, 1
    %s16 = ssub.s32 %s10, 2
    %s17 = sadd.s32 %s10, 1
    %s18 = ssub.s32 %s10, %s17
    %p19 = scmp.eq.s32.totalorder %s18, 0
    %s21 = sadd.s32 %s20, 1
    %s22 = scalar_select %p19, %s20, %s21
    %p25 = pneg %p19
    %p26 = scmp.eq.s32.totalorder %s10, 1
    %p27 = por %p25, %p26
    %p28 = scmp.ne.s32.totalorder %s20, %s23
    %p29 = scmp.eq.s32.totalorder %s10, 0
    %p30 = por %p28, %p29
    %p31 = scmp.ne.s32.totalorder %s20, %s23
    %p32 = scmp.eq.s32.totalorder %s15, 1
    %p33 = por %p31, %p32
    %p34 = scmp.ne.s32.totalorder %s23, %s24
    %p35 = scmp.eq.s32.totalorder %s15, 0
    %p36 = por %p34, %p35
    %p37 = scmp.ne.s32.totalorder %s23, %s24
    %p38 = scmp.eq.s32.totalorder %s16, 1
    %p39 = por %p37, %p38
    %p41 = scmp.ne.s32.totalorder %s24, %s40
    %p42 = scmp.eq.s32.totalorder %s16, 0
    %p43 = por %p41, %p42
    %s44 = ssub.s32 %s10, %s17
    %p45 = scmp.eq.s32.totalorder %s44, 0
    %s47 = sadd.s32 %s46, 1
    %s48 = scalar_select %p45, %s46, %s47
    %p51 = pneg %p45
    %p52 = scmp.eq.s32.totalorder %s10, 1
    %p53 = por %p51, %p52
    %p54 = scmp.ne.s32.totalorder %s46, %s49
    %p55 = scmp.eq.s32.totalorder %s10, 0
    %p56 = por %p54, %p55
    %p57 = scmp.ne.s32.totalorder %s46, %s49
    %p58 = scmp.eq.s32.totalorder %s15, 1
    %p59 = por %p57, %p58
    %p60 = scmp.ne.s32.totalorder %s49, %s50
    %p61 = scmp.eq.s32.totalorder %s15, 0
    %p62 = por %p60, %p61
    %p63 = scmp.ne.s32.totalorder %s49, %s50
    %p64 = scmp.eq.s32.totalorder %s16, 1
    %p65 = por %p63, %p64
    %p67 = scmp.ne.s32.totalorder %s50, %s66
    %p68 = scmp.eq.s32.totalorder %s16, 0
    %p69 = por %p67, %p68
    %s70 = ssub.s32 %s10, %s17
    %p71 = scmp.eq.s32.totalorder %s70, 0
    %s73 = sadd.s32 %s72, 1
    %s74 = scalar_select %p71, %s72, %s73
    %p77 = pneg %p71
    %p78 = scmp.eq.s32.totalorder %s10, 1
    %p79 = por %p77, %p78
    %p80 = scmp.ne.s32.totalorder %s72, %s75
    %p81 = scmp.eq.s32.totalorder %s10, 0
    %p82 = por %p80, %p81
    %p83 = scmp.ne.s32.totalorder %s72, %s75
    %p84 = scmp.eq.s32.totalorder %s15, 1
    %p85 = por %p83, %p84
    %p86 = scmp.ne.s32.totalorder %s75, %s76
    %p87 = scmp.eq.s32.totalorder %s15, 0
    %p88 = por %p86, %p87
    %p89 = scmp.ne.s32.totalorder %s75, %s76
    %p90 = scmp.eq.s32.totalorder %s16, 1
    %p91 = por %p89, %p90
    %p93 = scmp.ne.s32.totalorder %s76, %s92
    %p94 = scmp.eq.s32.totalorder %s16, 0
    %p95 = por %p93, %p94
    %s96 = ssub.s32 %s10, %s17
    %p97 = scmp.eq.s32.totalorder %s96, 0
    %s99 = sadd.s32 %s98, 1
    %s100 = scalar_select %p97, %s98, %s99
    %p103 = pneg %p97
    %p104 = scmp.eq.s32.totalorder %s10, 1
    %p105 = por %p103, %p104
    %p106 = scmp.ne.s32.totalorder %s98, %s101
    %p107 = scmp.eq.s32.totalorder %s10, 0
    %p108 = por %p106, %p107
    %p109 = scmp.ne.s32.totalorder %s98, %s101
    %p110 = scmp.eq.s32.totalorder %s15, 1
    %p111 = por %p109, %p110
    %p112 = scmp.ne.s32.totalorder %s101, %s102
    %p113 = scmp.eq.s32.totalorder %s15, 0
    %p114 = por %p112, %p113
    %p115 = scmp.ne.s32.totalorder %s101, %s102
    %p116 = scmp.eq.s32.totalorder %s16, 1
    %p117 = por %p115, %p116
    %p119 = scmp.ne.s32.totalorder %s102, %s118
    %p120 = scmp.eq.s32.totalorder %s16, 0
    %p121 = por %p119, %p120
    %p122 = scmp.le.s32.totalorder 1, %s10
    %p123 = scmp.lt.s32.totalorder %s10, 3
    %p124 = pnand %p122, %p123
    %p125 = pneg %p124
    // Predicated region
    $region9: #{tpu_custom_call.1} parent=5 // pred_check
      _
    $region10: #{tpu_custom_call.1} parent=5 // pred_check_branch
      %127 = sbr.rel (%p124) target = $region12
    $region11: #{tpu_custom_call.1} parent=5 // pred_region
      %s128 = ssub.s32 %s10, 1
    $region12: #{tpu_custom_call.1} parent=5 // pred_fallthru
      _
    %p129 = scmp.lt.s32.totalorder %s10, 2
    // Predicated region
    $region13: #{tpu_custom_call.1} parent=5 // pred_check
      %p130 = pneg %p129
    $region14: #{tpu_custom_call.1} parent=5 // pred_check_branch
      %132 = sbr.rel (%p130) target = $region16
    $region15: #{tpu_custom_call.1} parent=5 // pred_region
      // Predicated region
      $region17: #{tpu_custom_call.1} parent=15 // pred_check
        %p133 = pneg %p30
      $region18: #{tpu_custom_call.1} parent=15 // pred_check_branch
        %135 = sbr.rel (%p133) target = $region20
      $region19: #{tpu_custom_call.1} parent=15 // pred_region
        %p136 = scmp.lt.s32.totalorder %s10, 1
        %s137 = scalar_select %p136, %s10, 1
        %s138 = smul.addr %s137, 8
        %s139 = smul.addr %s138, 8
        %s140 = scalar_lea.vmem %s0, %s139
      $region20: #{tpu_custom_call.1} parent=15 // pred_fallthru
        _
      // Predicated region
      $region21: #{tpu_custom_call.1} parent=15 // pred_check
        %p141 = pneg %p56
      $region22: #{tpu_custom_call.1} parent=15 // pred_check_branch
        %143 = sbr.rel (%p141) target = $region24
      $region23: #{tpu_custom_call.1} parent=15 // pred_region
        %p144 = scmp.lt.s32.totalorder %s10, 1
        %s145 = scalar_select %p144, %s10, 1
        %s146 = smul.addr %s145, 8
        %s147 = smul.addr %s146, 8
        %s148 = scalar_lea.vmem %s1, %s147
      $region24: #{tpu_custom_call.1} parent=15 // pred_fallthru
        _
    $region16: #{tpu_custom_call.1} parent=5 // pred_fallthru
      _
    %p149 = scmp.le.s32.totalorder 1, %s10
    %p150 = scmp.lt.s32.totalorder %s10, 3
    %p151 = pnand %p149, %p150
    %p152 = pneg %p151
    // Predicated region
    $region25: #{tpu_custom_call.1} parent=5 // pred_check
      _
    $region26: #{tpu_custom_call.1} parent=5 // pred_check_branch
      %154 = sbr.rel (%p151) target = $region28
    $region27: #{tpu_custom_call.1} parent=5 // pred_region
      %s155 = ssub.s32 %s10, 1
      %p156 = scmp.lt.s32.totalorder %s15, 1
      %s157 = scalar_select %p156, %s15, 1
      %s158 = smul.addr %s157, 8
      %s159 = smul.addr %s158, 8
      %s160 = scalar_lea.vmem %s0, %s159
      %p161 = pneg %p36
      %p162 = pneg %p33
      %p163 = scmp.lt.s32.totalorder %s15, 1
      %s164 = scalar_select %p163, %s15, 1
      %s165 = smul.addr %s164, 8
      %s166 = smul.addr %s165, 8
      %s167 = scalar_lea.vmem %s1, %s166
      %p168 = pneg %p62
      %p169 = pneg %p59
      %p170 = pneg %p88
      %p171 = pneg %p85
      %p172 = scmp.lt.s32.totalorder %s15, 1
      %s173 = scalar_select %p172, %s15, 1
      %s174 = smul.addr %s173, 8
      %s175 = smul.addr %s174, 8
      %s176 = scalar_lea.vmem %s2, %s175
      %p177 = pneg %p114
      %p178 = pneg %p111
      %p179 = scmp.lt.s32.totalorder %s15, 1
      %s180 = scalar_select %p179, %s15, 1
      %s181 = smul.addr %s180, 8
      %s182 = smul.addr %s181, 8
      %s183 = scalar_lea.vmem %s3, %s182
      %p184 = scmp.lt.s32.totalorder %s15, 1
      %s185 = scalar_select %p184, %s15, 1
      %s186 = smul.addr %s185, 8
      %s187 = smul.addr %s186, 8
      %s188 = scalar_lea.vmem %s0, %s187
      %p189 = scmp.lt.s32.totalorder %s15, 1
      %s190 = scalar_select %p189, %s15, 1
      %s191 = smul.addr %s190, 8
      %s192 = smul.addr %s191, 8
      %s193 = scalar_lea.vmem %s1, %s192
      %p194 = scmp.lt.s32.totalorder %s15, 1
      %s195 = scalar_select %p194, %s15, 1
      %s196 = smul.addr %s195, 8
      %s197 = smul.addr %s196, 8
      %s198 = scalar_lea.vmem %s2, %s197
      %p199 = scmp.lt.s32.totalorder %s15, 1
      %s200 = scalar_select %p199, %s15, 1
      %s201 = smul.addr %s200, 8
      %s202 = smul.addr %s201, 8
      %s203 = scalar_lea.vmem %s3, %s202
      %v204 = vld [vmem:[%s188] sm:$0xff]
      %v205 = vld [vmem:[%s188 + $0x8] sm:$0xff]
      %v206 = vld [vmem:[%s188 + $0x10] sm:$0xff]
      %v207 = vld [vmem:[%s188 + $0x18] sm:$0xff]
      %v208 = vld [vmem:[%s188 + $0x20] sm:$0xff]
      %v209 = vld [vmem:[%s188 + $0x28] sm:$0xff]
      %v210 = vld [vmem:[%s188 + $0x30] sm:$0xff]
      %v211 = vld [vmem:[%s188 + $0x38] sm:$0xff]
      %v212 = vld [vmem:[%s193] sm:$0xff]
      %v213 = vld [vmem:[%s193 + $0x8] sm:$0xff]
      %v214 = vld [vmem:[%s193 + $0x10] sm:$0xff]
      %v215 = vld [vmem:[%s193 + $0x18] sm:$0xff]
      %v216 = vld [vmem:[%s193 + $0x20] sm:$0xff]
      %v217 = vld [vmem:[%s193 + $0x28] sm:$0xff]
      %v218 = vld [vmem:[%s193 + $0x30] sm:$0xff]
      %v219 = vld [vmem:[%s193 + $0x38] sm:$0xff]
      %vm220 = vcmask 261120
      %v222 = vsel %vm220, %v204, 0
      %v225 = vsel %vm220, %v205, 0
      %v228 = vsel %vm220, %v206, 0
      %v231 = vsel %vm220, %v207, 0
      %v234 = vsel %vm220, %v208, 0
      %v237 = vsel %vm220, %v209, 0
      %v240 = vsel %vm220, %v210, 0
      %v243 = vsel %vm220, %v211, 0
      %v246 = vsel %vm220, %v212, 0
      %v249 = vsel %vm220, %v213, 0
      %v252 = vsel %vm220, %v214, 0
      %v255 = vsel %vm220, %v215, 0
      %v258 = vsel %vm220, %v216, 0
      %v261 = vsel %vm220, %v217, 0
      %v264 = vsel %vm220, %v218, 0
      %v267 = vsel %vm220, %v219, 0
      %269 = vmatprep.subr.mxu0 0.0
      %270 = vmatpush1.xpose.msra.mxu0 0.0
      %271 = vmatprep.subr.mxu0 0.0
      %272 = vmatpush1.xpose.msra.mxu0 0.0
      %273 = vmatprep.subr.mxu0 0.0
      %274 = vmatpush1.xpose.msra.mxu0 0.0
      %275 = vmatprep.subr.mxu0 0.0
      %276 = vmatpush1.xpose.msra.mxu0 0.0
      %277 = vmatprep.subr.mxu0 0.0
      %278 = vmatpush1.xpose.msra.mxu0 0.0
      %279 = vmatprep.subr.mxu0 0.0
      %280 = vmatpush1.xpose.msra.mxu0 0.0
      %281 = vmatprep.subr.mxu0 0.0
      %282 = vmatpush1.xpose.msra.mxu0 0.0
      %283 = vmatprep.subr.mxu0 0.0
      %284 = vmatpush1.xpose.msra.mxu0 0.0
      %285 = vmatprep.subr.mxu0 0.0
      %286 = vmatpush1.xpose.msra.mxu0 %v267
      %287 = vmatprep.subr.mxu0 0.0
      %288 = vmatpush1.xpose.msra.mxu0 %v264
      %289 = vmatprep.subr.mxu0 0.0
      %290 = vmatpush1.xpose.msra.mxu0 %v261
      %291 = vmatprep.subr.mxu0 0.0
      %292 = vmatpush1.xpose.msra.mxu0 %v258
      %293 = vmatprep.subr.mxu0 0.0
      %294 = vmatpush1.xpose.msra.mxu0 %v255
      %295 = vmatprep.subr.mxu0 0.0
      %296 = vmatpush1.xpose.msra.mxu0 %v252
      %297 = vmatprep.subr.mxu0 0.0
      %298 = vmatpush1.xpose.msra.mxu0 %v249
      %299 = vmatprep.subr.mxu0 0.0
      %300 = vmatpush1.xpose.msra.mxu0 %v246
      %301 = vmatprep.subr.mxu0 0.0
      %302 = vmatpush2.xpose.msra.mxu0 0.0
      %303 = vmatprep.subr.mxu0 0.0
      %304 = vmatpush2.xpose.msra.mxu0 0.0
      %305 = vmatprep.subr.mxu0 0.0
      %306 = vmatpush2.xpose.msra.mxu0 0.0
      %307 = vmatprep.subr.mxu0 0.0
      %308 = vmatpush2.xpose.msra.mxu0 0.0
      %309 = vmatprep.subr.mxu0 0.0
      %310 = vmatpush2.xpose.msra.mxu0 0.0
      %311 = vmatprep.subr.mxu0 0.0
      %312 = vmatpush2.xpose.msra.mxu0 0.0
      %313 = vmatprep.subr.mxu0 0.0
      %314 = vmatpush2.xpose.msra.mxu0 0.0
      %315 = vmatprep.subr.mxu0 0.0
      %316 = vmatpush2.xpose.msra.mxu0 0.0
      %317 = vmatprep.subr.mxu0 0.0
      %318 = vmatpush2.xpose.msra.mxu0 0.0
      %319 = vmatprep.subr.mxu0 0.0
      %320 = vmatpush2.xpose.msra.mxu0 0.0
      %321 = vmatprep.subr.mxu0 0.0
      %322 = vmatpush2.xpose.msra.mxu0 0.0
      %323 = vmatprep.subr.mxu0 0.0
      %324 = vmatpush2.xpose.msra.mxu0 0.0
      %325 = vmatprep.subr.mxu0 0.0
      %326 = vmatpush2.xpose.msra.mxu0 0.0
      %327 = vmatprep.subr.mxu0 0.0
      %328 = vmatpush2.xpose.msra.mxu0 0.0
      %329 = vmatprep.subr.mxu0 0.0
      %330 = vmatpush2.xpose.msra.mxu0 0.0
      %331 = vmatprep.subr.mxu0 0.0
      %332 = vmatpush2.xpose.msra.mxu0 0.0
      %333 = vmatprep.mubr.f32.mxu0 0.0
      %334 = vmatmul.mubr.f32.gmra.mxu0 %v222
      %v335 = vpop.f32.mrf.mxu0
      %v336 = vadd.f32 0.0, %v335
      %v337 = vpop.f32.mrf.mxu0
      %338 = vmatprep.mubr.f32.mxu0 0.0
      %339 = vmatmul.mubr.f32.gmra.mxu0 %v225
      %v340 = vpop.f32.mrf.mxu0
      %v341 = vadd.f32 0.0, %v340
      %v342 = vpop.f32.mrf.mxu0
      %343 = vmatprep.mubr.f32.mxu0 0.0
      %344 = vmatmul.mubr.f32.gmra.mxu0 %v228
      %v345 = vpop.f32.mrf.mxu0
      %v346 = vadd.f32 0.0, %v345
      %v347 = vpop.f32.mrf.mxu0
      %348 = vmatprep.mubr.f32.mxu0 0.0
      %349 = vmatmul.mubr.f32.gmra.mxu0 %v231
      %v350 = vpop.f32.mrf.mxu0
      %v351 = vadd.f32 0.0, %v350
      %v352 = vpop.f32.mrf.mxu0
      %353 = vmatprep.mubr.f32.mxu0 0.0
      %354 = vmatmul.mubr.f32.gmra.mxu0 %v234
      %v355 = vpop.f32.mrf.mxu0
      %v356 = vadd.f32 0.0, %v355
      %v357 = vpop.f32.mrf.mxu0
      %358 = vmatprep.mubr.f32.mxu0 0.0
      %359 = vmatmul.mubr.f32.gmra.mxu0 %v237
      %v360 = vpop.f32.mrf.mxu0
      %v361 = vadd.f32 0.0, %v360
      %v362 = vpop.f32.mrf.mxu0
      %363 = vmatprep.mubr.f32.mxu0 0.0
      %364 = vmatmul.mubr.f32.gmra.mxu0 %v240
      %v365 = vpop.f32.mrf.mxu0
      %v366 = vadd.f32 0.0, %v365
      %v367 = vpop.f32.mrf.mxu0
      %368 = vmatprep.mubr.f32.mxu0 0.0
      %369 = vmatmul.mubr.f32.gmra.mxu0 %v243
      %v370 = vpop.f32.mrf.mxu0
      %v371 = vadd.f32 0.0, %v370
      %v372 = vpop.f32.mrf.mxu0
      %373 = vdwg.mxu0
      %v374 = vlaneseq
      %v375 = vand.u32 %v374, 127
      %v376 = vcvt.s32.f32 %v375
      %vm377 = vcmask 523264
      %v378 = vsel %vm377, %v336, -inf
      %379 = vmax.xlane.f32.xlu0 %v378
      %v380 = vpop.xlane.xlu0 %379
      %v381 = vsel %vm377, %v341, -inf
      %382 = vmax.xlane.f32.xlu0 %v381
      %v383 = vpop.xlane.xlu0 %382
      %v384 = vsel %vm377, %v346, -inf
      %385 = vmax.xlane.f32.xlu0 %v384
      %v386 = vpop.xlane.xlu0 %385
      %v387 = vsel %vm377, %v351, -inf
      %388 = vmax.xlane.f32.xlu0 %v387
      %v389 = vpop.xlane.xlu0 %388
      %v390 = vsel %vm377, %v356, -inf
      %391 = vmax.xlane.f32.xlu0 %v390
      %v392 = vpop.xlane.xlu0 %391
      %v393 = vsel %vm377, %v361, -inf
      %394 = vmax.xlane.f32.xlu0 %v393
      %v395 = vpop.xlane.xlu0 %394
      %v396 = vsel %vm377, %v366, -inf
      %397 = vmax.xlane.f32.xlu0 %v396
      %v398 = vpop.xlane.xlu0 %397
      %v399 = vsel %vm377, %v371, -inf
      %400 = vmax.xlane.f32.xlu0 %v399
      %v401 = vpop.xlane.xlu0 %400
      %vm402 = vcmp.eq.f32.partialorder %v336, %v380
      %vm403 = vcmp.eq.f32.partialorder %v341, %v383
      %vm404 = vcmp.eq.f32.partialorder %v346, %v386
      %vm405 = vcmp.eq.f32.partialorder %v351, %v389
      %vm406 = vcmp.eq.f32.partialorder %v356, %v392
      %vm407 = vcmp.eq.f32.partialorder %v361, %v395
      %vm408 = vcmp.eq.f32.partialorder %v366, %v398
      %vm409 = vcmp.eq.f32.partialorder %v371, %v401
      %v410 = vsel %vm402, %v376, 64.0
      %v411 = vsel %vm403, %v376, 64.0
      %v412 = vsel %vm404, %v376, 64.0
      %v413 = vsel %vm405, %v376, 64.0
      %v414 = vsel %vm406, %v376, 64.0
      %v415 = vsel %vm407, %v376, 64.0
      %v416 = vsel %vm408, %v376, 64.0
      %v417 = vsel %vm409, %v376, 64.0
      %v418 = vsel %vm377, %v410, inf
      %419 = vmin.xlane.f32.xlu0 %v418
      %v420 = vpop.xlane.xlu0 %419
      %v421 = vsel %vm377, %v411, inf
      %422 = vmin.xlane.f32.xlu0 %v421
      %v423 = vpop.xlane.xlu0 %422
      %v424 = vsel %vm377, %v412, inf
      %425 = vmin.xlane.f32.xlu0 %v424
      %v426 = vpop.xlane.xlu0 %425
      %v427 = vsel %vm377, %v413, inf
      %428 = vmin.xlane.f32.xlu0 %v427
      %v429 = vpop.xlane.xlu0 %428
      %v430 = vsel %vm377, %v414, inf
      %431 = vmin.xlane.f32.xlu0 %v430
      %v432 = vpop.xlane.xlu0 %431
      %v433 = vsel %vm377, %v415, inf
      %434 = vmin.xlane.f32.xlu0 %v433
      %v435 = vpop.xlane.xlu0 %434
      %v436 = vsel %vm377, %v416, inf
      %437 = vmin.xlane.f32.xlu0 %v436
      %v438 = vpop.xlane.xlu0 %437
      %v439 = vsel %vm377, %v417, inf
      %440 = vmin.xlane.f32.xlu0 %v439
      %v441 = vpop.xlane.xlu0 %440
      %vm442 = vcmp.eq.f32.partialorder %v376, %v420
      %vm443 = vcmp.eq.f32.partialorder %v376, %v423
      %vm444 = vcmp.eq.f32.partialorder %v376, %v426
      %vm445 = vcmp.eq.f32.partialorder %v376, %v429
      %vm446 = vcmp.eq.f32.partialorder %v376, %v432
      %vm447 = vcmp.eq.f32.partialorder %v376, %v435
      %vm448 = vcmp.eq.f32.partialorder %v376, %v438
      %vm449 = vcmp.eq.f32.partialorder %v376, %v441
      %v450 = vsel %vm442, -1e+30, %v336
      %v451 = vsel %vm443, -1e+30, %v341
      %v452 = vsel %vm444, -1e+30, %v346
      %v453 = vsel %vm445, -1e+30, %v351
      %v454 = vsel %vm446, -1e+30, %v356
      %v455 = vsel %vm447, -1e+30, %v361
      %v456 = vsel %vm448, -1e+30, %v366
      %v457 = vsel %vm449, -1e+30, %v371
      %vm458 = vcmp.eq.s32.totalorder %v375, 0
      %v459 = vsel %vm458, %v380, -1e+30
      %v460 = vsel %vm458, %v383, -1e+30
      %v461 = vsel %vm458, %v386, -1e+30
      %v462 = vsel %vm458, %v389, -1e+30
      %v463 = vsel %vm458, %v392, -1e+30
      %v464 = vsel %vm458, %v395, -1e+30
      %v465 = vsel %vm458, %v398, -1e+30
      %v466 = vsel %vm458, %v401, -1e+30
      %v467 = vsel %vm458, %v420, 0.0
      %v468 = vsel %vm458, %v423, 0.0
      %v469 = vsel %vm458, %v426, 0.0
      %v470 = vsel %vm458, %v429, 0.0
      %v471 = vsel %vm458, %v432, 0.0
      %v472 = vsel %vm458, %v435, 0.0
      %v473 = vsel %vm458, %v438, 0.0
      %v474 = vsel %vm458, %v441, 0.0
      %v475 = vsel %vm377, %v450, -inf
      %476 = vmax.xlane.f32.xlu0 %v475
      %v477 = vpop.xlane.xlu0 %476
      %v478 = vsel %vm377, %v451, -inf
      %479 = vmax.xlane.f32.xlu0 %v478
      %v480 = vpop.xlane.xlu0 %479
      %v481 = vsel %vm377, %v452, -inf
      %482 = vmax.xlane.f32.xlu0 %v481
      %v483 = vpop.xlane.xlu0 %482
      %v484 = vsel %vm377, %v453, -inf
      %485 = vmax.xlane.f32.xlu0 %v484
      %v486 = vpop.xlane.xlu0 %485
      %v487 = vsel %vm377, %v454, -inf
      %488 = vmax.xlane.f32.xlu0 %v487
      %v489 = vpop.xlane.xlu0 %488
      %v490 = vsel %vm377, %v455, -inf
      %491 = vmax.xlane.f32.xlu0 %v490
      %v492 = vpop.xlane.xlu0 %491
      %v493 = vsel %vm377, %v456, -inf
      %494 = vmax.xlane.f32.xlu0 %v493
      %v495 = vpop.xlane.xlu0 %494
      %v496 = vsel %vm377, %v457, -inf
      %497 = vmax.xlane.f32.xlu0 %v496
      %v498 = vpop.xlane.xlu0 %497
      %vm499 = vcmp.eq.f32.partialorder %v450, %v477
      %vm500 = vcmp.eq.f32.partialorder %v451, %v480
      %vm501 = vcmp.eq.f32.partialorder %v452, %v483
      %vm502 = vcmp.eq.f32.partialorder %v453, %v486
      %vm503 = vcmp.eq.f32.partialorder %v454, %v489
      %vm504 = vcmp.eq.f32.partialorder %v455, %v492
      %vm505 = vcmp.eq.f32.partialorder %v456, %v495
      %vm506 = vcmp.eq.f32.partialorder %v457, %v498
      %v507 = vsel %vm499, %v376, 64.0
      %v508 = vsel %vm500, %v376, 64.0
      %v509 = vsel %vm501, %v376, 64.0
      %v510 = vsel %vm502, %v376, 64.0
      %v511 = vsel %vm503, %v376, 64.0
      %v512 = vsel %vm504, %v376, 64.0
      %v513 = vsel %vm505, %v376, 64.0
      %v514 = vsel %vm506, %v376, 64.0
      %v515 = vsel %vm377, %v507, inf
      %516 = vmin.xlane.f32.xlu0 %v515
      %v517 = vpop.xlane.xlu0 %516
      %v518 = vsel %vm377, %v508, inf
      %519 = vmin.xlane.f32.xlu0 %v518
      %v520 = vpop.xlane.xlu0 %519
      %v521 = vsel %vm377, %v509, inf
      %522 = vmin.xlane.f32.xlu0 %v521
      %v523 = vpop.xlane.xlu0 %522
      %v524 = vsel %vm377, %v510, inf
      %525 = vmin.xlane.f32.xlu0 %v524
      %v526 = vpop.xlane.xlu0 %525
      %v527 = vsel %vm377, %v511, inf
      %528 = vmin.xlane.f32.xlu0 %v527
      %v529 = vpop.xlane.xlu0 %528
      %v530 = vsel %vm377, %v512, inf
      %531 = vmin.xlane.f32.xlu0 %v530
      %v532 = vpop.xlane.xlu0 %531
      %v533 = vsel %vm377, %v513, inf
      %534 = vmin.xlane.f32.xlu0 %v533
      %v535 = vpop.xlane.xlu0 %534
      %v536 = vsel %vm377, %v514, inf
      %537 = vmin.xlane.f32.xlu0 %v536
      %v538 = vpop.xlane.xlu0 %537
      %vm539 = vcmp.eq.f32.partialorder %v376, %v517
      %vm540 = vcmp.eq.f32.partialorder %v376, %v520
      %vm541 = vcmp.eq.f32.partialorder %v376, %v523
      %vm542 = vcmp.eq.f32.partialorder %v376, %v526
      %vm543 = vcmp.eq.f32.partialorder %v376, %v529
      %vm544 = vcmp.eq.f32.partialorder %v376, %v532
      %vm545 = vcmp.eq.f32.partialorder %v376, %v535
      %vm546 = vcmp.eq.f32.partialorder %v376, %v538
      %v547 = vsel %vm539, -1e+30, %v450
      %v548 = vsel %vm540, -1e+30, %v451
      %v549 = vsel %vm541, -1e+30, %v452
      %v550 = vsel %vm542, -1e+30, %v453
      %v551 = vsel %vm543, -1e+30, %v454
      %v552 = vsel %vm544, -1e+30, %v455
      %v553 = vsel %vm545, -1e+30, %v456
      %v554 = vsel %vm546, -1e+30, %v457
      %vm555 = vcmp.eq.s32.totalorder %v375, 1
      %v556 = vsel %vm555, %v477, %v459
      %v557 = vsel %vm555, %v480, %v460
      %v558 = vsel %vm555, %v483, %v461
      %v559 = vsel %vm555, %v486, %v462
      %v560 = vsel %vm555, %v489, %v463
      %v561 = vsel %vm555, %v492, %v464
      %v562 = vsel %vm555, %v495, %v465
      %v563 = vsel %vm555, %v498, %v466
      %v564 = vsel %vm555, %v517, %v467
      %v565 = vsel %vm555, %v520, %v468
      %v566 = vsel %vm555, %v523, %v469
      %v567 = vsel %vm555, %v526, %v470
      %v568 = vsel %vm555, %v529, %v471
      %v569 = vsel %vm555, %v532, %v472
      %v570 = vsel %vm555, %v535, %v473
      %v571 = vsel %vm555, %v538, %v474
      %v572 = vsel %vm377, %v547, -inf
      %573 = vmax.xlane.f32.xlu0 %v572
      %v574 = vpop.xlane.xlu0 %573
      %v575 = vsel %vm377, %v548, -inf
      %576 = vmax.xlane.f32.xlu0 %v575
      %v577 = vpop.xlane.xlu0 %576
      %v578 = vsel %vm377, %v549, -inf
      %579 = vmax.xlane.f32.xlu0 %v578
      %v580 = vpop.xlane.xlu0 %579
      %v581 = vsel %vm377, %v550, -inf
      %582 = vmax.xlane.f32.xlu0 %v581
      %v583 = vpop.xlane.xlu0 %582
      %v584 = vsel %vm377, %v551, -inf
      %585 = vmax.xlane.f32.xlu0 %v584
      %v586 = vpop.xlane.xlu0 %585
      %v587 = vsel %vm377, %v552, -inf
      %588 = vmax.xlane.f32.xlu0 %v587
      %v589 = vpop.xlane.xlu0 %588
      %v590 = vsel %vm377, %v553, -inf
      %591 = vmax.xlane.f32.xlu0 %v590
      %v592 = vpop.xlane.xlu0 %591
      %v593 = vsel %vm377, %v554, -inf
      %594 = vmax.xlane.f32.xlu0 %v593
      %v595 = vpop.xlane.xlu0 %594
      %vm596 = vcmp.eq.f32.partialorder %v547, %v574
      %vm597 = vcmp.eq.f32.partialorder %v548, %v577
      %vm598 = vcmp.eq.f32.partialorder %v549, %v580
      %vm599 = vcmp.eq.f32.partialorder %v550, %v583
      %vm600 = vcmp.eq.f32.partialorder %v551, %v586
      %vm601 = vcmp.eq.f32.partialorder %v552, %v589
      %vm602 = vcmp.eq.f32.partialorder %v553, %v592
      %vm603 = vcmp.eq.f32.partialorder %v554, %v595
      %v604 = vsel %vm596, %v376, 64.0
      %v605 = vsel %vm597, %v376, 64.0
      %v606 = vsel %vm598, %v376, 64.0
      %v607 = vsel %vm599, %v376, 64.0
      %v608 = vsel %vm600, %v376, 64.0
      %v609 = vsel %vm601, %v376, 64.0
      %v610 = vsel %vm602, %v376, 64.0
      %v611 = vsel %vm603, %v376, 64.0
      %v612 = vsel %vm377, %v604, inf
      %613 = vmin.xlane.f32.xlu0 %v612
      %v614 = vpop.xlane.xlu0 %613
      %v615 = vsel %vm377, %v605, inf
      %616 = vmin.xlane.f32.xlu0 %v615
      %v617 = vpop.xlane.xlu0 %616
      %v618 = vsel %vm377, %v606, inf
      %619 = vmin.xlane.f32.xlu0 %v618
      %v620 = vpop.xlane.xlu0 %619
      %v621 = vsel %vm377, %v607, inf
      %622 = vmin.xlane.f32.xlu0 %v621
      %v623 = vpop.xlane.xlu0 %622
      %v624 = vsel %vm377, %v608, inf
      %625 = vmin.xlane.f32.xlu0 %v624
      %v626 = vpop.xlane.xlu0 %625
      %v627 = vsel %vm377, %v609, inf
      %628 = vmin.xlane.f32.xlu0 %v627
      %v629 = vpop.xlane.xlu0 %628
      %v630 = vsel %vm377, %v610, inf
      %631 = vmin.xlane.f32.xlu0 %v630
      %v632 = vpop.xlane.xlu0 %631
      %v633 = vsel %vm377, %v611, inf
      %634 = vmin.xlane.f32.xlu0 %v633
      %v635 = vpop.xlane.xlu0 %634
      %vm636 = vcmp.eq.f32.partialorder %v376, %v614
      %vm637 = vcmp.eq.f32.partialorder %v376, %v617
      %vm638 = vcmp.eq.f32.partialorder %v376, %v620
      %vm639 = vcmp.eq.f32.partialorder %v376, %v623
      %vm640 = vcmp.eq.f32.partialorder %v376, %v626
      %vm641 = vcmp.eq.f32.partialorder %v376, %v629
      %vm642 = vcmp.eq.f32.partialorder %v376, %v632
      %vm643 = vcmp.eq.f32.partialorder %v376, %v635
      %v644 = vsel %vm636, -1e+30, %v547
      %v645 = vsel %vm637, -1e+30, %v548
      %v646 = vsel %vm638, -1e+30, %v549
      %v647 = vsel %vm639, -1e+30, %v550
      %v648 = vsel %vm640, -1e+30, %v551
      %v649 = vsel %vm641, -1e+30, %v552
      %v650 = vsel %vm642, -1e+30, %v553
      %v651 = vsel %vm643, -1e+30, %v554
      %vm652 = vcmp.eq.s32.totalorder %v375, 2
      %v653 = vsel %vm652, %v574, %v556
      %v654 = vsel %vm652, %v577, %v557
      %v655 = vsel %vm652, %v580, %v558
      %v656 = vsel %vm652, %v583, %v559
      %v657 = vsel %vm652, %v586, %v560
      %v658 = vsel %vm652, %v589, %v561
      %v659 = vsel %vm652, %v592, %v562
      %v660 = vsel %vm652, %v595, %v563
      %v661 = vsel %vm652, %v614, %v564
      %v662 = vsel %vm652, %v617, %v565
      %v663 = vsel %vm652, %v620, %v566
      %v664 = vsel %vm652, %v623, %v567
      %v665 = vsel %vm652, %v626, %v568
      %v666 = vsel %vm652, %v629, %v569
      %v667 = vsel %vm652, %v632, %v570
      %v668 = vsel %vm652, %v635, %v571
      %v669 = vsel %vm377, %v644, -inf
      %670 = vmax.xlane.f32.xlu0 %v669
      %v671 = vpop.xlane.xlu0 %670
      %v672 = vsel %vm377, %v645, -inf
      %673 = vmax.xlane.f32.xlu0 %v672
      %v674 = vpop.xlane.xlu0 %673
      %v675 = vsel %vm377, %v646, -inf
      %676 = vmax.xlane.f32.xlu0 %v675
      %v677 = vpop.xlane.xlu0 %676
      %v678 = vsel %vm377, %v647, -inf
      %679 = vmax.xlane.f32.xlu0 %v678
      %v680 = vpop.xlane.xlu0 %679
      %v681 = vsel %vm377, %v648, -inf
      %682 = vmax.xlane.f32.xlu0 %v681
      %v683 = vpop.xlane.xlu0 %682
      %v684 = vsel %vm377, %v649, -inf
      %685 = vmax.xlane.f32.xlu0 %v684
      %v686 = vpop.xlane.xlu0 %685
      %v687 = vsel %vm377, %v650, -inf
      %688 = vmax.xlane.f32.xlu0 %v687
      %v689 = vpop.xlane.xlu0 %688
      %v690 = vsel %vm377, %v651, -inf
      %691 = vmax.xlane.f32.xlu0 %v690
      %v692 = vpop.xlane.xlu0 %691
      %vm693 = vcmp.eq.f32.partialorder %v644, %v671
      %vm694 = vcmp.eq.f32.partialorder %v645, %v674
      %vm695 = vcmp.eq.f32.partialorder %v646, %v677
      %vm696 = vcmp.eq.f32.partialorder %v647, %v680
      %vm697 = vcmp.eq.f32.partialorder %v648, %v683
      %vm698 = vcmp.eq.f32.partialorder %v649, %v686
      %vm699 = vcmp.eq.f32.partialorder %v650, %v689
      %vm700 = vcmp.eq.f32.partialorder %v651, %v692
      %v701 = vsel %vm693, %v376, 64.0
      %v702 = vsel %vm694, %v376, 64.0
      %v703 = vsel %vm695, %v376, 64.0
      %v704 = vsel %vm696, %v376, 64.0
      %v705 = vsel %vm697, %v376, 64.0
      %v706 = vsel %vm698, %v376, 64.0
      %v707 = vsel %vm699, %v376, 64.0
      %v708 = vsel %vm700, %v376, 64.0
      %v709 = vsel %vm377, %v701, inf
      %710 = vmin.xlane.f32.xlu0 %v709
      %v711 = vpop.xlane.xlu0 %710
      %v712 = vsel %vm377, %v702, inf
      %713 = vmin.xlane.f32.xlu0 %v712
      %v714 = vpop.xlane.xlu0 %713
      %v715 = vsel %vm377, %v703, inf
      %716 = vmin.xlane.f32.xlu0 %v715
      %v717 = vpop.xlane.xlu0 %716
      %v718 = vsel %vm377, %v704, inf
      %719 = vmin.xlane.f32.xlu0 %v718
      %v720 = vpop.xlane.xlu0 %719
      %v721 = vsel %vm377, %v705, inf
      %722 = vmin.xlane.f32.xlu0 %v721
      %v723 = vpop.xlane.xlu0 %722
      %v724 = vsel %vm377, %v706, inf
      %725 = vmin.xlane.f32.xlu0 %v724
      %v726 = vpop.xlane.xlu0 %725
      %v727 = vsel %vm377, %v707, inf
      %728 = vmin.xlane.f32.xlu0 %v727
      %v729 = vpop.xlane.xlu0 %728
      %v730 = vsel %vm377, %v708, inf
      %731 = vmin.xlane.f32.xlu0 %v730
      %v732 = vpop.xlane.xlu0 %731
      %vm733 = vcmp.eq.s32.totalorder %v375, 3
      %v734 = vsel %vm733, %v671, %v653
      %v735 = vsel %vm733, %v674, %v654
      %v736 = vsel %vm733, %v677, %v655
      %v737 = vsel %vm733, %v680, %v656
      %v738 = vsel %vm733, %v683, %v657
      %v739 = vsel %vm733, %v686, %v658
      %v740 = vsel %vm733, %v689, %v659
      %v741 = vsel %vm733, %v692, %v660
      %v742 = vsel %vm733, %v711, %v661
      %v743 = vsel %vm733, %v714, %v662
      %v744 = vsel %vm733, %v717, %v663
      %v745 = vsel %vm733, %v720, %v664
      %v746 = vsel %vm733, %v723, %v665
      %v747 = vsel %vm733, %v726, %v666
      %v748 = vsel %vm733, %v729, %v667
      %v749 = vsel %vm733, %v732, %v668
      %v750 = vsub.f32 %v734, %v380
      %v751 = vsub.f32 %v735, %v383
      %v752 = vsub.f32 %v736, %v386
      %v753 = vsub.f32 %v737, %v389
      %v754 = vsub.f32 %v738, %v392
      %v755 = vsub.f32 %v739, %v395
      %v756 = vsub.f32 %v740, %v398
      %v757 = vsub.f32 %v741, %v401
      %v758 = vmul.f32 %v750, 0.17677669
      %v759 = vmul.f32 %v751, 0.17677669
      %v760 = vmul.f32 %v752, 0.17677669
      %v761 = vmul.f32 %v753, 0.17677669
      %v762 = vmul.f32 %v754, 0.17677669
      %v763 = vmul.f32 %v755, 0.17677669
      %v764 = vmul.f32 %v756, 0.17677669
      %v765 = vmul.f32 %v757, 0.17677669
      %v766 = vmul.f32 %v758, 1.442695
      %v767 = vpow.pop %v766
      %v768 = vmul.f32 %v759, 1.442695
      %v769 = vpow.pop %v768
      %v770 = vmul.f32 %v760, 1.442695
      %v771 = vpow.pop %v770
      %v772 = vmul.f32 %v761, 1.442695
      %v773 = vpow.pop %v772
      %v774 = vmul.f32 %v762, 1.442695
      %v775 = vpow.pop %v774
      %v776 = vmul.f32 %v763, 1.442695
      %v777 = vpow.pop %v776
      %v778 = vmul.f32 %v764, 1.442695
      %v779 = vpow.pop %v778
      %v780 = vmul.f32 %v765, 1.442695
      %v781 = vpow.pop %v780
      %vm782 = vcmask 31744
      %v783 = vsel %vm782, %v767, 0.0
      %784 = vadd.xlane.f32.xlu0 %v783
      %v785 = vpop.xlane.xlu0 %784
      %v786 = vsel %vm782, %v769, 0.0
      %787 = vadd.xlane.f32.xlu0 %v786
      %v788 = vpop.xlane.xlu0 %787
      %v789 = vsel %vm782, %v771, 0.0
      %790 = vadd.xlane.f32.xlu0 %v789
      %v791 = vpop.xlane.xlu0 %790
      %v792 = vsel %vm782, %v773, 0.0
      %793 = vadd.xlane.f32.xlu0 %v792
      %v794 = vpop.xlane.xlu0 %793
      %v795 = vsel %vm782, %v775, 0.0
      %796 = vadd.xlane.f32.xlu0 %v795
      %v797 = vpop.xlane.xlu0 %796
      %v798 = vsel %vm782, %v777, 0.0
      %799 = vadd.xlane.f32.xlu0 %v798
      %v800 = vpop.xlane.xlu0 %799
      %v801 = vsel %vm782, %v779, 0.0
      %802 = vadd.xlane.f32.xlu0 %v801
      %v803 = vpop.xlane.xlu0 %802
      %v804 = vsel %vm782, %v781, 0.0
      %805 = vadd.xlane.f32.xlu0 %v804
      %v806 = vpop.xlane.xlu0 %805
      %v807 = vrcp.pop %v785
      %v808 = vrcp.pop %v788
      %v809 = vrcp.pop %v791
      %v810 = vrcp.pop %v794
      %v811 = vrcp.pop %v797
      %v812 = vrcp.pop %v800
      %v813 = vrcp.pop %v803
      %v814 = vrcp.pop %v806
      %v815 = vmul.f32 %v767, %v807
      %v816 = vmul.f32 %v769, %v808
      %v817 = vmul.f32 %v771, %v809
      %v818 = vmul.f32 %v773, %v810
      %v819 = vmul.f32 %v775, %v811
      %v820 = vmul.f32 %v777, %v812
      %v821 = vmul.f32 %v779, %v813
      %v822 = vmul.f32 %v781, %v814
      %823 = vst.msk [vmem:[%s198] sm:$0xff] %vm782, %v815
      %824 = vst.msk [vmem:[%s198 + $0x8] sm:$0xff] %vm782, %v816
      %825 = vst.msk [vmem:[%s198 + $0x10] sm:$0xff] %vm782, %v817
      %826 = vst.msk [vmem:[%s198 + $0x18] sm:$0xff] %vm782, %v818
      %827 = vst.msk [vmem:[%s198 + $0x20] sm:$0xff] %vm782, %v819
      %828 = vst.msk [vmem:[%s198 + $0x28] sm:$0xff] %vm782, %v820
      %829 = vst.msk [vmem:[%s198 + $0x30] sm:$0xff] %vm782, %v821
      %830 = vst.msk [vmem:[%s198 + $0x38] sm:$0xff] %vm782, %v822
      %v831 = vcvt.f32.s32.to.zero.pseudo %v742
      %v832 = vcvt.f32.s32.to.zero.pseudo %v743
      %v833 = vcvt.f32.s32.to.zero.pseudo %v744
      %v834 = vcvt.f32.s32.to.zero.pseudo %v745
      %v835 = vcvt.f32.s32.to.zero.pseudo %v746
      %v836 = vcvt.f32.s32.to.zero.pseudo %v747
      %v837 = vcvt.f32.s32.to.zero.pseudo %v748
      %v838 = vcvt.f32.s32.to.zero.pseudo %v749
      %839 = vst.msk [vmem:[%s203] sm:$0xff] %vm782, %v831
      %840 = vst.msk [vmem:[%s203 + $0x8] sm:$0xff] %vm782, %v832
      %841 = vst.msk [vmem:[%s203 + $0x10] sm:$0xff] %vm782, %v833
      %842 = vst.msk [vmem:[%s203 + $0x18] sm:$0xff] %vm782, %v834
      %843 = vst.msk [vmem:[%s203 + $0x20] sm:$0xff] %vm782, %v835
      %844 = vst.msk [vmem:[%s203 + $0x28] sm:$0xff] %vm782, %v836
      %845 = vst.msk [vmem:[%s203 + $0x30] sm:$0xff] %vm782, %v837
      %846 = vst.msk [vmem:[%s203 + $0x38] sm:$0xff] %vm782, %v838
      %p847 = scmp.lt.s32.totalorder %s15, 1
      %s848 = scalar_select %p847, %s15, 1
      %s849 = smul.addr %s848, 8
      %s850 = smul.addr %s849, 8
      %s851 = scalar_lea.vmem %s2, %s850
      %p852 = scmp.lt.s32.totalorder %s15, 1
      %s853 = scalar_select %p852, %s15, 1
      %s854 = smul.addr %s853, 8
      %s855 = smul.addr %s854, 8
      %s856 = scalar_lea.vmem %s3, %s855
      // Predicated region
      $region29: #{tpu_custom_call.1} parent=27 // pred_check
        %p857 = pneg %p85
      $region30: #{tpu_custom_call.1} parent=27 // pred_check_branch
        %859 = sbr.rel (%p857) target = $region32
      $region31: #{tpu_custom_call.1} parent=27 // pred_region
        _
      $region32: #{tpu_custom_call.1} parent=27 // pred_fallthru
        _
      // Predicated region
      $region33: #{tpu_custom_call.1} parent=27 // pred_check
        %p860 = pneg %p111
      $region34: #{tpu_custom_call.1} parent=27 // pred_check_branch
        %862 = sbr.rel (%p860) target = $region36
      $region35: #{tpu_custom_call.1} parent=27 // pred_region
        _
      $region36: #{tpu_custom_call.1} parent=27 // pred_fallthru
        _
    $region28: #{tpu_custom_call.1} parent=5 // pred_fallthru
      _
    %p863 = scmp.le.s32.totalorder 2, %s10
    // Predicated region
    $region37: #{tpu_custom_call.1} parent=5 // pred_check
      %p864 = pneg %p863
    $region38: #{tpu_custom_call.1} parent=5 // pred_check_branch
      %866 = sbr.rel (%p864) target = $region40
    $region39: #{tpu_custom_call.1} parent=5 // pred_region
      %s867 = ssub.s32 %s10, 2
      // Predicated region
      $region41: #{tpu_custom_call.1} parent=39 // pred_check
        %p868 = pneg %p91
      $region42: #{tpu_custom_call.1} parent=39 // pred_check_branch
        %870 = sbr.rel (%p868) target = $region44
      $region43: #{tpu_custom_call.1} parent=39 // pred_region
        %p871 = scmp.lt.s32.totalorder %s16, 1
        %s872 = scalar_select %p871, %s16, 1
        %s873 = smul.addr %s872, 8
        %s874 = smul.addr %s873, 8
        %s875 = scalar_lea.vmem %s2, %s874
      $region44: #{tpu_custom_call.1} parent=39 // pred_fallthru
        _
      // Predicated region
      $region45: #{tpu_custom_call.1} parent=39 // pred_check
        %p876 = pneg %p117
      $region46: #{tpu_custom_call.1} parent=39 // pred_check_branch
        %878 = sbr.rel (%p876) target = $region48
      $region47: #{tpu_custom_call.1} parent=39 // pred_region
        %p879 = scmp.lt.s32.totalorder %s16, 1
        %s880 = scalar_select %p879, %s16, 1
        %s881 = smul.addr %s880, 8
        %s882 = smul.addr %s881, 8
        %s883 = scalar_lea.vmem %s3, %s882
      $region48: #{tpu_custom_call.1} parent=39 // pred_fallthru
        _
    $region40: #{tpu_custom_call.1} parent=5 // pred_fallthru
      _
  $region6: #{tpu_custom_call.1} parent=0 // loop_footer
    %s14 = sadd.s32 1, %s10
  $region7: #{tpu_custom_call.1} parent=0 // loop_footer_branch
    %9 = sbr.rel target = $region3
  $region8: #{tpu_custom_call.1} parent=0 // loop_exit
    _

</llo_original>
